<compile_context>
chip_gen: v7x
topology: tpu7x:2x2x1
jax: 0.10.0
libtpu: 0.0.40
codegen_flags: <defaults>
</compile_context>

<pallas_src>
import functools

import jax
import jax.numpy as jnp
from jax.experimental import pallas as pl
from jax.experimental.pallas import tpu as pltpu


def _round_up(n: int, m: int) -> int:
    return ((n + m - 1) // m) * m


def _vae_kernel(
    x_ref, eps_ref,
    w1_ref, whead_ref, wd1_ref, wd2_ref,
    bias_ref,
    out_ref, stats_ref,
    *, d_h_p: int, d_z: int, head_n: int, d_x_p: int,
):
    f32 = jnp.float32
    cdt = w1_ref.dtype        # MXU compute dtype (bfloat16)

    x = x_ref[...]
    eps = eps_ref[...]        # [tb, head_n]; eps values pre-placed at lanes [d_z, 2*d_z)

    # Unpack the consolidated bias slab (static, 128-aligned slices, f32).
    off = 0
    b1 = bias_ref[:, off:off + d_h_p]; off += d_h_p
    bhead = bias_ref[:, off:off + head_n]; off += head_n
    bd1 = bias_ref[:, off:off + d_h_p]; off += d_h_p
    bd2 = bias_ref[:, off:off + d_x_p]

    # ---- encoder ----
    h = jnp.maximum(
        jnp.dot(x.astype(cdt), w1_ref[...], preferred_element_type=f32) + b1, 0.0)

    # Fused mu|log_var head packed into head_n lanes:
    #   lanes [0, d_z)      -> mu
    #   lanes [d_z, 2*d_z)  -> log_var
    head = jnp.maximum(
        jnp.dot(h.astype(cdt), whead_ref[...], preferred_element_type=f32) + bhead, 0.0)

    # ---- reparametrization trick (f32, in head lane space; no cross-lane shuffle) ----
    lane = jax.lax.broadcasted_iota(jnp.int32, head.shape, 1)
    mu_part = jnp.where(lane < d_z, head, 0.0)          # mu at lanes [0, d_z), 0 elsewhere
    noise_part = jnp.exp(head * 0.5) * eps               # std*eps at lanes [d_z, 2*d_z), 0 elsewhere
    z_split = mu_part + noise_part                        # z = lane-group[0,d_z) + lane-group[d_z,2d_z)

    # ---- decoder ----
    # wd1 rows are duplicated for the two lane groups, so z_split @ wd1_dup == z @ wd1.
    d = jnp.maximum(
        jnp.dot(z_split.astype(cdt), wd1_ref[...], preferred_element_type=f32) + bd1, 0.0)
    out = jnp.maximum(
        jnp.dot(d.astype(cdt), wd2_ref[...], preferred_element_type=f32) + bd2, 0.0)

    # Lane-dense, 128-aligned direct stores (no concatenate temporary).
    out_ref[...] = out
    stats_ref[:, :head_n] = z_split
    stats_ref[:, head_n:] = head


def pack_params(params, *, mxu_dtype=jnp.bfloat16):
    """One-time padding/packing of weights (hoisted out of the per-call path)."""
    w1 = jnp.asarray(params["w1"], jnp.float32)
    d_x, d_hidden = w1.shape
    d_z = params["wmu"].shape[1]

    d_x_p = _round_up(d_x, 128)
    d_h_p = _round_up(d_hidden, 128)
    head_n = _round_up(2 * d_z, 128)          # packed mu|log_var lane width

    def pad2(a, rows, cols):
        a = jnp.asarray(a, jnp.float32)
        return jnp.pad(a, ((0, rows - a.shape[0]), (0, cols - a.shape[1])))

    # Fused encoder head: columns [0, d_z)=wmu, [d_z, 2*d_z)=wlv.
    whead_raw = jnp.concatenate(
        [jnp.asarray(params["wmu"], jnp.float32),
         jnp.asarray(params["wlv"], jnp.float32)], axis=1)            # [d_h, 2*d_z]
    bhead_raw = jnp.concatenate(
        [jnp.asarray(params["bmu"], jnp.float32),
         jnp.asarray(params["blv"], jnp.float32)], axis=1)            # [1, 2*d_z]

    # Decoder first layer with duplicated rows: rows [0,d_z) and [d_z,2*d_z) both = wd1.
    wd1_raw = jnp.asarray(params["wd1"], jnp.float32)                 # [d_z, d_h]
    wd1_dup = jnp.concatenate([wd1_raw, wd1_raw], axis=0)             # [2*d_z, d_h]

    packed = dict(
        w1=pad2(params["w1"], d_x_p, d_h_p).astype(mxu_dtype),
        whead=pad2(whead_raw, d_h_p, head_n).astype(mxu_dtype),
        wd1=pad2(wd1_dup, head_n, d_h_p).astype(mxu_dtype),
        wd2=pad2(params["wd2"], d_h_p, d_x_p).astype(mxu_dtype),
        bias=jnp.concatenate(
            [pad2(params["b1"], 1, d_h_p),
             pad2(bhead_raw, 1, head_n),
             pad2(params["bd1"], 1, d_h_p),
             pad2(params["bd2"], 1, d_x_p)], axis=1),                 # f32, [1, W]
        dims=dict(d_x=d_x, d_hidden=d_hidden, d_z=d_z,
                  d_x_p=d_x_p, d_h_p=d_h_p, head_n=head_n),
    )
    return packed


def vae_forward(x, eps, packed, *, tb: int | None = None):
    """Run the VAE forward pass.

    Args:
      x:      [B, d_x] float32 input batch.
      eps:    [B, d_z] float32 standard-normal noise (reparametrization trick).
      packed: output of pack_params().
      tb:     optional batch tile size (rows per grid step).

    Returns:
      (output [B, d_x], z [B, d_z], mu [B, d_z], log_var [B, d_z])
    """
    dims = packed["dims"]
    d_x, d_z = dims["d_x"], dims["d_z"]
    d_x_p, d_h_p, head_n = dims["d_x_p"], dims["d_h_p"], dims["head_n"]

    B = x.shape[0]
    b_p = _round_up(B, 8)
    if tb is None:
        if b_p <= 16:
            tb = b_p
        else:
            # >=2 grid steps so v7x's two TensorCores can shard the "parallel" axis;
            # cap at 256 rows (fills the 256-wide MXU on v6e/v7x, fine on v5e).
            tb = min(256, max(8, _round_up((b_p + 1) // 2, 8)))
    b_p = _round_up(b_p, tb)
    grid = (b_p // tb,)

    f32 = jnp.float32
    stats_n = 2 * head_n

    # Per-call layout plumbing (activations only; weights were packed once).
    x_p = jnp.pad(jnp.asarray(x, f32), ((0, b_p - B), (0, d_x_p - d_x)))
    # eps is placed at lanes [d_z, 2*d_z) so it lines up with the log_var lanes.
    eps_p = jnp.pad(jnp.asarray(eps, f32), ((0, b_p - B), (d_z, head_n - 2 * d_z)))

    # VMEM budget: weights single-buffered (Buffered(1)) + double-buffered activation tiles.
    weight_bytes = sum(int(packed[k].size) * packed[k].dtype.itemsize
                       for k in ("w1", "whead", "wd1", "wd2", "bias"))
    act_bytes = 2 * 4 * tb * (d_x_p + head_n + d_x_p + stats_n)
    vmem_needed = weight_bytes + act_bytes
    if vmem_needed > (40 << 20):
        # TODO(synk): for d_hidden/d_x past ~2K, replace the resident-weight design
        # with a K-tiled reduction grid axis over d_h instead of raising.
        raise ValueError("Weight set too large for resident-weight VAE kernel "
                         f"({vmem_needed / 2**20:.1f} MiB); needs K-tiling.")
    vmem_limit = min(max(2 * vmem_needed, 32 << 20), 64 << 20)

    flops = 2 * b_p * (d_x_p * d_h_p + d_h_p * head_n + head_n * d_h_p + d_h_p * d_x_p)
    bytes_accessed = (int(x_p.size) + int(eps_p.size)) * 4 + weight_bytes \
        + b_p * (d_x_p + stats_n) * 4
    cost = pl.CostEstimate(flops=flops, transcendentals=b_p * head_n,
                           bytes_accessed=bytes_accessed)

    kernel = functools.partial(
        _vae_kernel, d_h_p=d_h_p, d_z=d_z, head_n=head_n, d_x_p=d_x_p)

    const = lambda i: (0, 0)
    in_specs = [
        pl.BlockSpec((tb, d_x_p), lambda i: (i, 0)),                                   # x
        pl.BlockSpec((tb, head_n), lambda i: (i, 0)),                                  # eps (lane-shifted)
        pl.BlockSpec((d_x_p, d_h_p), const, pipeline_mode=pl.Buffered(1)),             # w1
        pl.BlockSpec((d_h_p, head_n), const, pipeline_mode=pl.Buffered(1)),            # whead (mu|lv)
        pl.BlockSpec((head_n, d_h_p), const, pipeline_mode=pl.Buffered(1)),            # wd1 (dup rows)
        pl.BlockSpec((d_h_p, d_x_p), const, pipeline_mode=pl.Buffered(1)),             # wd2
        pl.BlockSpec(packed["bias"].shape, const, pipeline_mode=pl.Buffered(1)),       # packed biases
    ]
    out_specs = (
        pl.BlockSpec((tb, d_x_p), lambda i: (i, 0)),                                   # reconstruction
        pl.BlockSpec((tb, stats_n), lambda i: (i, 0)),                                 # [z_split | mu|log_var]
    )
    out_shapes = (
        jax.ShapeDtypeStruct((b_p, d_x_p), f32),
        jax.ShapeDtypeStruct((b_p, stats_n), f32),
    )

    out_p, stats_p = pl.pallas_call(
        kernel,
        out_shape=out_shapes,
        grid=grid,
        in_specs=in_specs,
        out_specs=out_specs,
        compiler_params=pltpu.CompilerParams(
            dimension_semantics=("parallel",),
            vmem_limit_bytes=vmem_limit),
        cost_estimate=cost,
    )(x_p, eps_p, packed["w1"], packed["whead"], packed["wd1"], packed["wd2"],
      packed["bias"])

    # Slice the lane-dense slabs back to logical shapes (z recombined from the two
    # lane groups: mu + std*eps).
    output = out_p[:B, :d_x]
    z = stats_p[:B, 0:d_z] + stats_p[:B, d_z:2 * d_z]
    mu = stats_p[:B, head_n:head_n + d_z]
    log_var = stats_p[:B, head_n + d_z:head_n + 2 * d_z]
    return output, z, mu, log_var


def init_params(key, d_x, d_hidden, d_z):
    """Deterministic init matching nn.Linear shapes (stored transposed: [in, out])."""
    ks = jax.random.split(key, 10)

    def linear(kw, kb, d_in, d_out):
        bound = 1.0 / jnp.sqrt(d_in)
        w = jax.random.uniform(kw, (d_in, d_out), jnp.float32, -bound, bound)
        b = jax.random.uniform(kb, (1, d_out), jnp.float32, -bound, bound)
        return w, b

    w1, b1 = linear(ks[0], ks[1], d_x, d_hidden)       # enc_layer1
    wmu, bmu = linear(ks[2], ks[3], d_hidden, d_z)     # enc_layer2_mu
    wlv, blv = linear(ks[4], ks[5], d_hidden, d_z)     # enc_layer2_log_var
    wd1, bd1 = linear(ks[6], ks[7], d_z, d_hidden)     # dec_layer1
    wd2, bd2 = linear(ks[8], ks[9], d_hidden, d_x)     # dec_layer2

    return dict(w1=w1, b1=b1, wmu=wmu, bmu=bmu, wlv=wlv, blv=blv,
                wd1=wd1, bd1=bd1, wd2=wd2, bd2=bd2)


if __name__ == "__main__":
    B, d_x, d_hidden, d_z = 8, 64, 32, 10

    key = jax.random.PRNGKey(0)
    k_param, k_x, k_eps = jax.random.split(key, 3)

    params = init_params(k_param, d_x, d_hidden, d_z)
    packed = pack_params(params)            # one-time weight padding/packing
    x = jax.random.normal(k_x, (B, d_x), jnp.float32)
    eps = jax.random.normal(k_eps, (B, d_z), jnp.float32)

    output, z, mu, log_var = jax.block_until_ready(vae_forward(x, eps, packed))

    # Reference check in plain JAX f32 (same epsilon, same params).
    # NOTE: the kernel runs its matmuls in bf16 with f32 accumulation, so the
    # tolerance is loosened accordingly.
    h = jax.nn.relu(x @ params["w1"] + params["b1"])
    mu_ref = jax.nn.relu(h @ params["wmu"] + params["bmu"])
    lv_ref = jax.nn.relu(h @ params["wlv"] + params["blv"])
    z_ref = mu_ref + jnp.exp(lv_ref / 2.0) * eps
    d = jax.nn.relu(z_ref @ params["wd1"] + params["bd1"])
    out_ref = jax.nn.relu(d @ params["wd2"] + params["bd2"])

    assert jnp.allclose(output, out_ref, atol=5e-2, rtol=5e-2)
    assert jnp.allclose(z, z_ref, atol=5e-2, rtol=5e-2)
    assert jnp.allclose(mu, mu_ref, atol=5e-2, rtol=5e-2)
    assert jnp.allclose(log_var, lv_ref, atol=5e-2, rtol=5e-2)

    print("KERNEL_OK")
</pallas_src>

<mosaic_0001>
module attributes {stable_mosaic.version = 11 : i64} {
  func.func @_vae_kernel(%arg0: i32, %arg1: memref<8x128xf32, #tpu.memory_space<vmem>>, %arg2: memref<8x128xf32, #tpu.memory_space<vmem>>, %arg3: memref<128x128xbf16, #tpu.memory_space<vmem>>, %arg4: memref<128x128xbf16, #tpu.memory_space<vmem>>, %arg5: memref<128x128xbf16, #tpu.memory_space<vmem>>, %arg6: memref<128x128xbf16, #tpu.memory_space<vmem>>, %arg7: memref<1x512xf32, #tpu.memory_space<vmem>>, %arg8: memref<8x128xf32, #tpu.memory_space<vmem>>, %arg9: memref<8x256xf32, #tpu.memory_space<vmem>>) attributes {dimension_semantics = [#tpu.dimension_semantics<parallel>], iteration_bounds = array<i64: 1>, scalar_prefetch = 0 : i64, scratch_operands = 0 : i64, tpu.core_type = #tpu.core_type<tc>, window_params = [{transform_indices = @transform_0, window_bounds = array<i64: 8, 128>}, {transform_indices = @transform_1, window_bounds = array<i64: 8, 128>}, {pipeline_mode = #tpu.pipeline_mode<synchronous>, transform_indices = @transform_2, window_bounds = array<i64: 128, 128>}, {pipeline_mode = #tpu.pipeline_mode<synchronous>, transform_indices = @transform_3, window_bounds = array<i64: 128, 128>}, {pipeline_mode = #tpu.pipeline_mode<synchronous>, transform_indices = @transform_4, window_bounds = array<i64: 128, 128>}, {pipeline_mode = #tpu.pipeline_mode<synchronous>, transform_indices = @transform_5, window_bounds = array<i64: 128, 128>}, {pipeline_mode = #tpu.pipeline_mode<synchronous>, transform_indices = @transform_6, window_bounds = array<i64: 1, 512>}, {transform_indices = @transform_7, window_bounds = array<i64: 8, 128>}, {transform_indices = @transform_8, window_bounds = array<i64: 8, 256>}]} {
    %c0 = arith.constant 0 : index
    %c0_0 = arith.constant 0 : index
    %0 = vector.load %arg1[%c0, %c0_0] : memref<8x128xf32, #tpu.memory_space<vmem>>, vector<8x128xf32>
    %c0_1 = arith.constant 0 : index
    %c0_2 = arith.constant 0 : index
    %1 = vector.load %arg2[%c0_1, %c0_2] : memref<8x128xf32, #tpu.memory_space<vmem>>, vector<8x128xf32>
    %c0_3 = arith.constant 0 : index
    %c0_4 = arith.constant 0 : index
    %2 = vector.load %arg7[%c0_3, %c0_4] : memref<1x512xf32, #tpu.memory_space<vmem>>, vector<1x128xf32>
    %c0_5 = arith.constant 0 : index
    %c128 = arith.constant 128 : index
    %3 = vector.load %arg7[%c0_5, %c128] : memref<1x512xf32, #tpu.memory_space<vmem>>, vector<1x128xf32>
    %c0_6 = arith.constant 0 : index
    %c256 = arith.constant 256 : index
    %4 = vector.load %arg7[%c0_6, %c256] : memref<1x512xf32, #tpu.memory_space<vmem>>, vector<1x128xf32>
    %c0_7 = arith.constant 0 : index
    %c384 = arith.constant 384 : index
    %5 = vector.load %arg7[%c0_7, %c384] : memref<1x512xf32, #tpu.memory_space<vmem>>, vector<1x128xf32>
    %6 = arith.truncf %0 : vector<8x128xf32> to vector<8x128xbf16>
    %c0_8 = arith.constant 0 : index
    %c0_9 = arith.constant 0 : index
    %7 = vector.load %arg3[%c0_8, %c0_9] : memref<128x128xbf16, #tpu.memory_space<vmem>>, vector<128x128xbf16>
    %cst = arith.constant dense<0.000000e+00> : vector<8x128xf32>
    %8 = tpu.matmul %6, %7, %cst {dimension_numbers = #tpu.dot_dimension_numbers<[1], [0], [0], [1], [0, 0, 1, 1], [], []>} : vector<8x128xbf16>, vector<128x128xbf16>, vector<8x128xf32> -> vector<8x128xf32>
    %9 = vector.broadcast %2 : vector<1x128xf32> to vector<8x128xf32>
    %10 = arith.addf %8, %9 : vector<8x128xf32>
    %cst_10 = arith.constant 0.000000e+00 : f32
    %11 = vector.broadcast %cst_10 : f32 to vector<8x128xf32>
    %12 = arith.maximumf %10, %11 : vector<8x128xf32>
    %13 = arith.truncf %12 : vector<8x128xf32> to vector<8x128xbf16>
    %c0_11 = arith.constant 0 : index
    %c0_12 = arith.constant 0 : index
    %14 = vector.load %arg4[%c0_11, %c0_12] : memref<128x128xbf16, #tpu.memory_space<vmem>>, vector<128x128xbf16>
    %cst_13 = arith.constant dense<0.000000e+00> : vector<8x128xf32>
    %15 = tpu.matmul %13, %14, %cst_13 {dimension_numbers = #tpu.dot_dimension_numbers<[1], [0], [0], [1], [0, 0, 1, 1], [], []>} : vector<8x128xbf16>, vector<128x128xbf16>, vector<8x128xf32> -> vector<8x128xf32>
    %16 = vector.broadcast %3 : vector<1x128xf32> to vector<8x128xf32>
    %17 = arith.addf %15, %16 : vector<8x128xf32>
    %cst_14 = arith.constant 0.000000e+00 : f32
    %18 = vector.broadcast %cst_14 : f32 to vector<8x128xf32>
    %19 = arith.maximumf %17, %18 : vector<8x128xf32>
    %20 = tpu.iota {dimensions = array<i32: 1>} : vector<8x128xi32>
    %c10_i32 = arith.constant 10 : i32
    %21 = vector.broadcast %c10_i32 : i32 to vector<8x128xi32>
    %22 = arith.cmpi slt, %20, %21 : vector<8x128xi32>
    %cst_15 = arith.constant 0.000000e+00 : f32
    %23 = vector.broadcast %cst_15 : f32 to vector<8x128xf32>
    %24 = arith.select %22, %19, %23 : vector<8x128xi1>, vector<8x128xf32>
    %cst_16 = arith.constant 5.000000e-01 : f32
    %25 = vector.broadcast %cst_16 : f32 to vector<8x128xf32>
    %26 = arith.mulf %19, %25 : vector<8x128xf32>
    %27 = math.exp %26 : vector<8x128xf32>
    %28 = arith.mulf %27, %1 : vector<8x128xf32>
    %29 = arith.addf %24, %28 : vector<8x128xf32>
    %30 = arith.truncf %29 : vector<8x128xf32> to vector<8x128xbf16>
    %c0_17 = arith.constant 0 : index
    %c0_18 = arith.constant 0 : index
    %31 = vector.load %arg5[%c0_17, %c0_18] : memref<128x128xbf16, #tpu.memory_space<vmem>>, vector<128x128xbf16>
    %cst_19 = arith.constant dense<0.000000e+00> : vector<8x128xf32>
    %32 = tpu.matmul %30, %31, %cst_19 {dimension_numbers = #tpu.dot_dimension_numbers<[1], [0], [0], [1], [0, 0, 1, 1], [], []>} : vector<8x128xbf16>, vector<128x128xbf16>, vector<8x128xf32> -> vector<8x128xf32>
    %33 = vector.broadcast %4 : vector<1x128xf32> to vector<8x128xf32>
    %34 = arith.addf %32, %33 : vector<8x128xf32>
    %cst_20 = arith.constant 0.000000e+00 : f32
    %35 = vector.broadcast %cst_20 : f32 to vector<8x128xf32>
    %36 = arith.maximumf %34, %35 : vector<8x128xf32>
    %37 = arith.truncf %36 : vector<8x128xf32> to vector<8x128xbf16>
    %c0_21 = arith.constant 0 : index
    %c0_22 = arith.constant 0 : index
    %38 = vector.load %arg6[%c0_21, %c0_22] : memref<128x128xbf16, #tpu.memory_space<vmem>>, vector<128x128xbf16>
    %cst_23 = arith.constant dense<0.000000e+00> : vector<8x128xf32>
    %39 = tpu.matmul %37, %38, %cst_23 {dimension_numbers = #tpu.dot_dimension_numbers<[1], [0], [0], [1], [0, 0, 1, 1], [], []>} : vector<8x128xbf16>, vector<128x128xbf16>, vector<8x128xf32> -> vector<8x128xf32>
    %40 = vector.broadcast %5 : vector<1x128xf32> to vector<8x128xf32>
    %41 = arith.addf %39, %40 : vector<8x128xf32>
    %cst_24 = arith.constant 0.000000e+00 : f32
    %42 = vector.broadcast %cst_24 : f32 to vector<8x128xf32>
    %43 = arith.maximumf %41, %42 : vector<8x128xf32>
    %c0_25 = arith.constant 0 : index
    %c0_26 = arith.constant 0 : index
    %44 = vector.load %arg8[%c0_25, %c0_26] : memref<8x128xf32, #tpu.memory_space<vmem>>, vector<8x128xf32>
    tpu.vector_store %arg8[%c0_25, %c0_26], %43 {strides = array<i32>} : memref<8x128xf32, #tpu.memory_space<vmem>>, vector<8x128xf32>,
    %c0_27 = arith.constant 0 : index
    %c0_28 = arith.constant 0 : index
    %45 = vector.load %arg9[%c0_27, %c0_28] : memref<8x256xf32, #tpu.memory_space<vmem>>, vector<8x128xf32>
    tpu.vector_store %arg9[%c0_27, %c0_28], %29 {strides = array<i32>} : memref<8x256xf32, #tpu.memory_space<vmem>>, vector<8x128xf32>,
    %c0_29 = arith.constant 0 : index
    %c128_30 = arith.constant 128 : index
    %46 = vector.load %arg9[%c0_29, %c128_30] : memref<8x256xf32, #tpu.memory_space<vmem>>, vector<8x128xf32>
    tpu.vector_store %arg9[%c0_29, %c128_30], %19 {strides = array<i32>} : memref<8x256xf32, #tpu.memory_space<vmem>>, vector<8x128xf32>,
    return
  }
  func.func @transform_0(%arg0: i32) -> (i32, i32) {
    %c0_i32 = arith.constant 0 : i32
    %c0_i32_0 = arith.constant 0 : i32
    return %arg0, %c0_i32 : i32, i32
  }
  func.func @transform_1(%arg0: i32) -> (i32, i32) {
    %c0_i32 = arith.constant 0 : i32
    %c0_i32_0 = arith.constant 0 : i32
    return %arg0, %c0_i32 : i32, i32
  }
  func.func @transform_2(%arg0: i32) -> (i32, i32) {
    %c0_i32 = arith.constant 0 : i32
    %c0_i32_0 = arith.constant 0 : i32
    %c0_i32_1 = arith.constant 0 : i32
    return %c0_i32, %c0_i32_0 : i32, i32
  }
  func.func @transform_3(%arg0: i32) -> (i32, i32) {
    %c0_i32 = arith.constant 0 : i32
    %c0_i32_0 = arith.constant 0 : i32
    %c0_i32_1 = arith.constant 0 : i32
    return %c0_i32, %c0_i32_0 : i32, i32
  }
  func.func @transform_4(%arg0: i32) -> (i32, i32) {
    %c0_i32 = arith.constant 0 : i32
    %c0_i32_0 = arith.constant 0 : i32
    %c0_i32_1 = arith.constant 0 : i32
    return %c0_i32, %c0_i32_0 : i32, i32
  }
  func.func @transform_5(%arg0: i32) -> (i32, i32) {
    %c0_i32 = arith.constant 0 : i32
    %c0_i32_0 = arith.constant 0 : i32
    %c0_i32_1 = arith.constant 0 : i32
    return %c0_i32, %c0_i32_0 : i32, i32
  }
  func.func @transform_6(%arg0: i32) -> (i32, i32) {
    %c0_i32 = arith.constant 0 : i32
    %c0_i32_0 = arith.constant 0 : i32
    %c0_i32_1 = arith.constant 0 : i32
    return %c0_i32, %c0_i32_0 : i32, i32
  }
  func.func @transform_7(%arg0: i32) -> (i32, i32) {
    %c0_i32 = arith.constant 0 : i32
    %c0_i32_0 = arith.constant 0 : i32
    return %arg0, %c0_i32 : i32, i32
  }
  func.func @transform_8(%arg0: i32) -> (i32, i32) {
    %c0_i32 = arith.constant 0 : i32
    %c0_i32_0 = arith.constant 0 : i32
    return %arg0, %c0_i32 : i32, i32
  }
}

</mosaic_0001>

<llo_original>
// kernel: tpu_custom_call.1
$region0: #{tpu_custom_call.1}
  #allocation0 [shape = 'u32[]', space=smem, size = 0x4, offset = 0x4, fixed_abs, tag = 'smem constant byte address 0x4 - core index']
  #allocation1 [shape = 'u32[144,128]{1,0:T(1,128)}', space=vmem, size = 0x12000, scoped, tag = 'internal scratch']
  %s0 = inlined_call_operand.hbm [shape: f32[8,128], index: 0, kind: input, shape index: {}]
  %s1 = inlined_call_operand.hbm [shape: f32[8,128], index: 1, kind: input, shape index: {}]
  %s2 = inlined_call_operand.hbm [shape: bf16[128,128], index: 2, kind: input, shape index: {}]
  %s3 = inlined_call_operand.hbm [shape: bf16[128,128], index: 3, kind: input, shape index: {}]
  %s4 = inlined_call_operand.hbm [shape: bf16[128,128], index: 4, kind: input, shape index: {}]
  %s5 = inlined_call_operand.hbm [shape: bf16[128,128], index: 5, kind: input, shape index: {}]
  %s6 = inlined_call_operand.vmem [shape: f32[1,512], index: 6, kind: input, shape index: {}]
  %s7 = inlined_call_operand.hbm [shape: f32[8,128], index: 7, kind: output, shape index: {0}]
  %s8 = inlined_call_operand.hbm [shape: f32[8,256], index: 8, kind: output, shape index: {1}]
  %9 = xla_tuple %s7, %s8
  %s10 = sld [smem:[#allocation0]]
  $region70: #{tpu_custom_call.1} parent=0
    _
  %s12 = ssub.s32 1, %s10
  %s13 = scalar_select 0, %s12, %s10
  $region1: #{tpu_custom_call.1} parent=0
    #allocation2 [shape = 'u8[4096]{0}', space=vmem, size = 0x1000, scoped, tag = 'input window, operand 0, single buffered']
    #allocation3 [shape = 's32[1]{0}', space=sflag, size = 0x4, scoped, tag = 'scoped memory for tpu_custom_call.1']
    #allocation4 [shape = 's32[1]{0}', space=sflag, size = 0x4, scoped, tag = 'scoped memory for tpu_custom_call.1']
    #allocation5 [shape = 'u8[4096]{0}', space=vmem, size = 0x1000, scoped, tag = 'input window, operand 1, single buffered']
    #allocation6 [shape = 's32[1]{0}', space=sflag, size = 0x4, scoped, tag = 'scoped memory for tpu_custom_call.1']
    #allocation7 [shape = 'u8[32768]{0}', space=vmem, size = 0x8000, scoped, tag = 'input window, operand 2, single buffered']
    #allocation8 [shape = 'u8[32768]{0}', space=vmem, size = 0x8000, scoped, tag = 'input window, operand 3, single buffered']
    #allocation9 [shape = 's32[1]{0}', space=sflag, size = 0x4, scoped, tag = 'scoped memory for tpu_custom_call.1']
    #allocation10 [shape = 'u8[32768]{0}', space=vmem, size = 0x8000, scoped, tag = 'input window, operand 4, single buffered']
    #allocation11 [shape = 'u8[32768]{0}', space=vmem, size = 0x8000, scoped, tag = 'input window, operand 5, single buffered']
    #allocation12 [shape = 's32[1]{0}', space=sflag, size = 0x4, scoped, tag = 'scoped memory for tpu_custom_call.1']
    #allocation13 [shape = 'u8[4096]{0}', space=vmem, size = 0x1000, scoped, tag = 'output window, operand 0, single buffered']
    #allocation14 [shape = 'u8[8192]{0}', space=vmem, size = 0x2000, scoped, tag = 'output window, operand 1, single buffered']
    #allocation15 [shape = 's32[1]{0}', space=sflag, size = 0x4, scoped, tag = 'scoped memory for tpu_custom_call.1']
    %14 = vsyncpa [#allocation3], 0
    %15 = vsyncpa [#allocation6], 0
    %16 = vsyncpa [#allocation9], 0
    %17 = vsyncpa [#allocation12], 0
    %18 = vsyncpa [#allocation4], 0
    %19 = vsyncpa [#allocation15], 0
    // Predicated region
    $region2: #{tpu_custom_call.1} parent=1 // pred_check
      _
    $region3: #{tpu_custom_call.1} parent=1 // pred_check_branch
      %21 = sbr.rel (0) target = $region5
    $region4: #{tpu_custom_call.1} parent=1 // pred_region
      %s23 = ssub.s32 128, 128
      %24 = vsyncadd [#allocation3], %s23
      %s26 = sshll.u32 [#allocation2], 4
      %s27 = int_to_ptr.vmem [resolvable:$true] %s26
      %29 = dma.hbm_to_vmem [thread:$0]  %s0, 128, %s27, [#allocation3]
    $region5: #{tpu_custom_call.1} parent=1 // pred_fallthru
      _
    // Predicated region
    $region6: #{tpu_custom_call.1} parent=1 // pred_check
      _
    $region7: #{tpu_custom_call.1} parent=1 // pred_check_branch
      %31 = sbr.rel (0) target = $region9
    $region8: #{tpu_custom_call.1} parent=1 // pred_region
      %s33 = ssub.s32 128, 128
      %34 = vsyncadd [#allocation6], %s33
      %s36 = sshll.u32 [#allocation5], 4
      %s37 = int_to_ptr.vmem [resolvable:$true] %s36
      %39 = dma.hbm_to_vmem [thread:$0]  %s1, 128, %s37, [#allocation6]
    $region9: #{tpu_custom_call.1} parent=1 // pred_fallthru
      _
    // Predicated region
    $region10: #{tpu_custom_call.1} parent=1 // pred_check
      _
    $region11: #{tpu_custom_call.1} parent=1 // pred_check_branch
      %41 = sbr.rel (0) target = $region13
    $region12: #{tpu_custom_call.1} parent=1 // pred_region
      %s43 = ssub.s32 1024, 1024
      %44 = vsyncadd [#allocation6], %s43
      %s45 = sshll.u32 [#allocation7], 4
      %s46 = int_to_ptr.vmem [resolvable:$true] %s45
      %51 = dma.hbm_to_vmem [thread:$0]  %s2, 1024, %s46, [#allocation6], 64, 64, 4
    $region13: #{tpu_custom_call.1} parent=1 // pred_fallthru
      _
    // Predicated region
    $region14: #{tpu_custom_call.1} parent=1 // pred_check
      _
    $region15: #{tpu_custom_call.1} parent=1 // pred_check_branch
      %53 = sbr.rel (0) target = $region17
    $region16: #{tpu_custom_call.1} parent=1 // pred_region
      %s55 = ssub.s32 1024, 1024
      %56 = vsyncadd [#allocation9], %s55
      %s57 = sshll.u32 [#allocation8], 4
      %s58 = int_to_ptr.vmem [resolvable:$true] %s57
      %63 = dma.hbm_to_vmem [thread:$0]  %s3, 1024, %s58, [#allocation9], 64, 64, 4
    $region17: #{tpu_custom_call.1} parent=1 // pred_fallthru
      _
    // Predicated region
    $region18: #{tpu_custom_call.1} parent=1 // pred_check
      _
    $region19: #{tpu_custom_call.1} parent=1 // pred_check_branch
      %65 = sbr.rel (0) target = $region21
    $region20: #{tpu_custom_call.1} parent=1 // pred_region
      %s67 = ssub.s32 1024, 1024
      %68 = vsyncadd [#allocation9], %s67
      %s69 = sshll.u32 [#allocation10], 4
      %s70 = int_to_ptr.vmem [resolvable:$true] %s69
      %75 = dma.hbm_to_vmem [thread:$0]  %s4, 1024, %s70, [#allocation9], 64, 64, 4
    $region21: #{tpu_custom_call.1} parent=1 // pred_fallthru
      _
    // Predicated region
    $region22: #{tpu_custom_call.1} parent=1 // pred_check
      _
    $region23: #{tpu_custom_call.1} parent=1 // pred_check_branch
      %77 = sbr.rel (0) target = $region25
    $region24: #{tpu_custom_call.1} parent=1 // pred_region
      %s79 = ssub.s32 1024, 1024
      %80 = vsyncadd [#allocation12], %s79
      %s81 = sshll.u32 [#allocation11], 4
      %s82 = int_to_ptr.vmem [resolvable:$true] %s81
      %87 = dma.hbm_to_vmem [thread:$0]  %s5, 1024, %s82, [#allocation12], 64, 64, 4
    $region25: #{tpu_custom_call.1} parent=1 // pred_fallthru
      _
    // Predicated region
    $region26: #{tpu_custom_call.1} parent=1 // pred_check
      _
    $region27: #{tpu_custom_call.1} parent=1 // pred_check_branch
      %89 = sbr.rel (0) target = $region29
    $region28: #{tpu_custom_call.1} parent=1 // pred_region
      _
    $region29: #{tpu_custom_call.1} parent=1 // pred_fallthru
      _
    // Predicated region
    $region30: #{tpu_custom_call.1} parent=1 // pred_check
      _
    $region31: #{tpu_custom_call.1} parent=1 // pred_check_branch
      %91 = sbr.rel (0) target = $region33
    $region32: #{tpu_custom_call.1} parent=1 // pred_region
      %92 = dma.done [#allocation3], 128
    $region33: #{tpu_custom_call.1} parent=1 // pred_fallthru
      _
    // Predicated region
    $region34: #{tpu_custom_call.1} parent=1 // pred_check
      _
    $region35: #{tpu_custom_call.1} parent=1 // pred_check_branch
      %94 = sbr.rel (0) target = $region37
    $region36: #{tpu_custom_call.1} parent=1 // pred_region
      %95 = dma.done [#allocation6], 128
    $region37: #{tpu_custom_call.1} parent=1 // pred_fallthru
      _
    // Predicated region
    $region38: #{tpu_custom_call.1} parent=1 // pred_check
      _
    $region39: #{tpu_custom_call.1} parent=1 // pred_check_branch
      %97 = sbr.rel (0) target = $region41
    $region40: #{tpu_custom_call.1} parent=1 // pred_region
      %98 = dma.done [#allocation6], 1024
    $region41: #{tpu_custom_call.1} parent=1 // pred_fallthru
      _
    // Predicated region
    $region42: #{tpu_custom_call.1} parent=1 // pred_check
      _
    $region43: #{tpu_custom_call.1} parent=1 // pred_check_branch
      %100 = sbr.rel (0) target = $region45
    $region44: #{tpu_custom_call.1} parent=1 // pred_region
      %101 = dma.done [#allocation9], 1024
    $region45: #{tpu_custom_call.1} parent=1 // pred_fallthru
      _
    // Predicated region
    $region46: #{tpu_custom_call.1} parent=1 // pred_check
      _
    $region47: #{tpu_custom_call.1} parent=1 // pred_check_branch
      %103 = sbr.rel (0) target = $region49
    $region48: #{tpu_custom_call.1} parent=1 // pred_region
      %104 = dma.done [#allocation9], 1024
    $region49: #{tpu_custom_call.1} parent=1 // pred_fallthru
      _
    // Predicated region
    $region50: #{tpu_custom_call.1} parent=1 // pred_check
      _
    $region51: #{tpu_custom_call.1} parent=1 // pred_check_branch
      %106 = sbr.rel (0) target = $region53
    $region52: #{tpu_custom_call.1} parent=1 // pred_region
      %107 = dma.done [#allocation12], 1024
    $region53: #{tpu_custom_call.1} parent=1 // pred_fallthru
      _
    %v109 = vld [vmem:[#allocation2] sm:$0xff]
    %v110 = vld [vmem:[#allocation5] sm:$0xff]
    %v111 = vld [vmem:[%s6] sm:$0x1]
    %v112 = vld [vmem:[%s6 + $0x1] sm:$0x1]
    %v113 = vld [vmem:[%s6 + $0x2] sm:$0x1]
    %v114 = vld [vmem:[%s6 + $0x3] sm:$0x1]
    %v115 = vpack.c.bf16 %v109, %v109
    %v116 = vld [vmem:[#allocation7] sm:$0xf]
    %v117 = vld [vmem:[#allocation7 + $0x4] sm:$0xf]
    %v118 = vld [vmem:[#allocation7 + $0x8] sm:$0xf]
    %v119 = vld [vmem:[#allocation7 + $0xc] sm:$0xf]
    %v120 = vld [vmem:[#allocation7 + $0x10] sm:$0xf]
    %v121 = vld [vmem:[#allocation7 + $0x14] sm:$0xf]
    %v122 = vld [vmem:[#allocation7 + $0x18] sm:$0xf]
    %v123 = vld [vmem:[#allocation7 + $0x1c] sm:$0xf]
    %v124 = vld [vmem:[#allocation7 + $0x20] sm:$0xf]
    %v125 = vld [vmem:[#allocation7 + $0x24] sm:$0xf]
    %v126 = vld [vmem:[#allocation7 + $0x28] sm:$0xf]
    %v127 = vld [vmem:[#allocation7 + $0x2c] sm:$0xf]
    %v128 = vld [vmem:[#allocation7 + $0x30] sm:$0xf]
    %v129 = vld [vmem:[#allocation7 + $0x34] sm:$0xf]
    %v130 = vld [vmem:[#allocation7 + $0x38] sm:$0xf]
    %v131 = vld [vmem:[#allocation7 + $0x3c] sm:$0xf]
    %v133 = vlaneseq
    %v134 = vshrl.u32 %v133, 7
    %v135 = vsub.s32 0, %v134
    %v136 = vrot.slane %v111, %v135
    %v154 = vunpack.c.l.b16 %v116
    %v155 = vunpack.c.l.b16 %v117
    %v156 = vunpack.c.l.b16 %v118
    %v157 = vunpack.c.l.b16 %v119
    %v158 = vunpack.c.l.b16 %v120
    %v159 = vunpack.c.l.b16 %v121
    %v160 = vunpack.c.l.b16 %v122
    %v161 = vunpack.c.l.b16 %v123
    %v162 = vunpack.c.l.b16 %v124
    %v163 = vunpack.c.l.b16 %v125
    %v164 = vunpack.c.l.b16 %v126
    %v165 = vunpack.c.l.b16 %v127
    %v166 = vunpack.c.l.b16 %v128
    %v167 = vunpack.c.l.b16 %v129
    %v168 = vunpack.c.l.b16 %v130
    %v169 = vunpack.c.l.b16 %v131
    %v170 = vpack.c.b16 %v155, %v154
    %v171 = vpack.c.b16 %v157, %v156
    %v172 = vpack.c.b16 %v159, %v158
    %v173 = vpack.c.b16 %v161, %v160
    %v174 = vpack.c.b16 %v163, %v162
    %v175 = vpack.c.b16 %v165, %v164
    %v176 = vpack.c.b16 %v167, %v166
    %v177 = vpack.c.b16 %v169, %v168
    %186 = vmatprep.subr.bf16.mxu0 0
    %187 = vmatpush1.bf16.msra.mxu0 %v170
    %188 = vmatprep.subr.bf16.mxu0 0
    %189 = vmatpush1.bf16.msra.mxu0 %v171
    %190 = vmatprep.subr.bf16.mxu0 0
    %191 = vmatpush1.bf16.msra.mxu0 %v172
    %192 = vmatprep.subr.bf16.mxu0 0
    %193 = vmatpush1.bf16.msra.mxu0 %v173
    %194 = vmatprep.subr.bf16.mxu0 0
    %195 = vmatpush1.bf16.msra.mxu0 %v174
    %196 = vmatprep.subr.bf16.mxu0 0
    %197 = vmatpush1.bf16.msra.mxu0 %v175
    %198 = vmatprep.subr.bf16.mxu0 0
    %199 = vmatpush1.bf16.msra.mxu0 %v176
    %200 = vmatprep.subr.bf16.mxu0 0
    %201 = vmatpush1.bf16.msra.mxu0 %v177
    %202 = vmatprep.subr.bf16.mxu0 0
    %203 = vmatpush1.bf16.msra.mxu0 0
    %204 = vmatprep.subr.bf16.mxu0 0
    %205 = vmatpush1.bf16.msra.mxu0 0
    %206 = vmatprep.subr.bf16.mxu0 0
    %207 = vmatpush1.bf16.msra.mxu0 0
    %208 = vmatprep.subr.bf16.mxu0 0
    %209 = vmatpush1.bf16.msra.mxu0 0
    %210 = vmatprep.subr.bf16.mxu0 0
    %211 = vmatpush1.bf16.msra.mxu0 0
    %212 = vmatprep.subr.bf16.mxu0 0
    %213 = vmatpush1.bf16.msra.mxu0 0
    %214 = vmatprep.subr.bf16.mxu0 0
    %215 = vmatpush1.bf16.msra.mxu0 0
    %216 = vmatprep.subr.bf16.mxu0 0
    %217 = vmatpush1.bf16.msra.mxu0 0
    %218 = vmatprep.mubr.bf16.mxu0 0
    %219 = vmatmul.mubr.bf16.gmra.mrb[0].mxu0 %v115
    %v220 = vpop.f32.mrb[0].mxu0
    %v221 = vadd.f32 %v136, %v220
    %v222 = vpop.f32.mrb[0].mxu0
    %v223 = vpop.f32.mrb[0].mxu0
    %v224 = vpop.f32.mrb[0].mxu0
    %225 = vdwg.mxu0
    %v226 = vmax.f32 %v221, 0.0
    %v227 = vpack.c.bf16 %v226, %v226
    %v228 = vld [vmem:[#allocation8] sm:$0xf]
    %v229 = vld [vmem:[#allocation8 + $0x4] sm:$0xf]
    %v230 = vld [vmem:[#allocation8 + $0x8] sm:$0xf]
    %v231 = vld [vmem:[#allocation8 + $0xc] sm:$0xf]
    %v232 = vld [vmem:[#allocation8 + $0x10] sm:$0xf]
    %v233 = vld [vmem:[#allocation8 + $0x14] sm:$0xf]
    %v234 = vld [vmem:[#allocation8 + $0x18] sm:$0xf]
    %v235 = vld [vmem:[#allocation8 + $0x1c] sm:$0xf]
    %v236 = vld [vmem:[#allocation8 + $0x20] sm:$0xf]
    %v237 = vld [vmem:[#allocation8 + $0x24] sm:$0xf]
    %v238 = vld [vmem:[#allocation8 + $0x28] sm:$0xf]
    %v239 = vld [vmem:[#allocation8 + $0x2c] sm:$0xf]
    %v240 = vld [vmem:[#allocation8 + $0x30] sm:$0xf]
    %v241 = vld [vmem:[#allocation8 + $0x34] sm:$0xf]
    %v242 = vld [vmem:[#allocation8 + $0x38] sm:$0xf]
    %v243 = vld [vmem:[#allocation8 + $0x3c] sm:$0xf]
    %v245 = vlaneseq
    %v246 = vshrl.u32 %v245, 7
    %v247 = vsub.s32 0, %v246
    %v248 = vrot.slane %v112, %v247
    %v266 = vunpack.c.l.b16 %v228
    %v267 = vunpack.c.l.b16 %v229
    %v268 = vunpack.c.l.b16 %v230
    %v269 = vunpack.c.l.b16 %v231
    %v270 = vunpack.c.l.b16 %v232
    %v271 = vunpack.c.l.b16 %v233
    %v272 = vunpack.c.l.b16 %v234
    %v273 = vunpack.c.l.b16 %v235
    %v274 = vunpack.c.l.b16 %v236
    %v275 = vunpack.c.l.b16 %v237
    %v276 = vunpack.c.l.b16 %v238
    %v277 = vunpack.c.l.b16 %v239
    %v278 = vunpack.c.l.b16 %v240
    %v279 = vunpack.c.l.b16 %v241
    %v280 = vunpack.c.l.b16 %v242
    %v281 = vunpack.c.l.b16 %v243
    %v282 = vpack.c.b16 %v267, %v266
    %v283 = vpack.c.b16 %v269, %v268
    %v284 = vpack.c.b16 %v271, %v270
    %v285 = vpack.c.b16 %v273, %v272
    %v286 = vpack.c.b16 %v275, %v274
    %v287 = vpack.c.b16 %v277, %v276
    %v288 = vpack.c.b16 %v279, %v278
    %v289 = vpack.c.b16 %v281, %v280
    %298 = vmatprep.subr.bf16.mxu0 0
    %299 = vmatpush1.bf16.msra.mxu0 %v282
    %300 = vmatprep.subr.bf16.mxu0 0
    %301 = vmatpush1.bf16.msra.mxu0 %v283
    %302 = vmatprep.subr.bf16.mxu0 0
    %303 = vmatpush1.bf16.msra.mxu0 %v284
    %304 = vmatprep.subr.bf16.mxu0 0
    %305 = vmatpush1.bf16.msra.mxu0 %v285
    %306 = vmatprep.subr.bf16.mxu0 0
    %307 = vmatpush1.bf16.msra.mxu0 %v286
    %308 = vmatprep.subr.bf16.mxu0 0
    %309 = vmatpush1.bf16.msra.mxu0 %v287
    %310 = vmatprep.subr.bf16.mxu0 0
    %311 = vmatpush1.bf16.msra.mxu0 %v288
    %312 = vmatprep.subr.bf16.mxu0 0
    %313 = vmatpush1.bf16.msra.mxu0 %v289
    %314 = vmatprep.subr.bf16.mxu0 0
    %315 = vmatpush1.bf16.msra.mxu0 0
    %316 = vmatprep.subr.bf16.mxu0 0
    %317 = vmatpush1.bf16.msra.mxu0 0
    %318 = vmatprep.subr.bf16.mxu0 0
    %319 = vmatpush1.bf16.msra.mxu0 0
    %320 = vmatprep.subr.bf16.mxu0 0
    %321 = vmatpush1.bf16.msra.mxu0 0
    %322 = vmatprep.subr.bf16.mxu0 0
    %323 = vmatpush1.bf16.msra.mxu0 0
    %324 = vmatprep.subr.bf16.mxu0 0
    %325 = vmatpush1.bf16.msra.mxu0 0
    %326 = vmatprep.subr.bf16.mxu0 0
    %327 = vmatpush1.bf16.msra.mxu0 0
    %328 = vmatprep.subr.bf16.mxu0 0
    %329 = vmatpush1.bf16.msra.mxu0 0
    %330 = vmatprep.mubr.bf16.mxu0 0
    %331 = vmatmul.mubr.bf16.gmra.mrb[0].mxu0 %v227
    %v332 = vpop.f32.mrb[0].mxu0
    %v333 = vadd.f32 %v248, %v332
    %v334 = vpop.f32.mrb[0].mxu0
    %v335 = vpop.f32.mrb[0].mxu0
    %v336 = vpop.f32.mrb[0].mxu0
    %337 = vdwg.mxu0
    %v338 = vmax.f32 %v333, 0.0
    %v339 = vlaneseq
    %v340 = vand.u32 %v339, 127
    %vm341 = vcmp.lt.s32.totalorder %v340, 10
    %v342 = vsel %vm341, %v338, 0.0
    %v343 = vmul.f32 %v338, 0.5
    %v344 = vmul.f32 %v343, 1.442695
    %v345 = vpow.pop %v344
    %v346 = vmul.f32 %v345, %v110
    %v347 = vadd.f32 %v342, %v346
    %v348 = vpack.c.bf16 %v347, %v347
    %v349 = vld [vmem:[#allocation10] sm:$0xf]
    %v350 = vld [vmem:[#allocation10 + $0x4] sm:$0xf]
    %v351 = vld [vmem:[#allocation10 + $0x8] sm:$0xf]
    %v352 = vld [vmem:[#allocation10 + $0xc] sm:$0xf]
    %v353 = vld [vmem:[#allocation10 + $0x10] sm:$0xf]
    %v354 = vld [vmem:[#allocation10 + $0x14] sm:$0xf]
    %v355 = vld [vmem:[#allocation10 + $0x18] sm:$0xf]
    %v356 = vld [vmem:[#allocation10 + $0x1c] sm:$0xf]
    %v357 = vld [vmem:[#allocation10 + $0x20] sm:$0xf]
    %v358 = vld [vmem:[#allocation10 + $0x24] sm:$0xf]
    %v359 = vld [vmem:[#allocation10 + $0x28] sm:$0xf]
    %v360 = vld [vmem:[#allocation10 + $0x2c] sm:$0xf]
    %v361 = vld [vmem:[#allocation10 + $0x30] sm:$0xf]
    %v362 = vld [vmem:[#allocation10 + $0x34] sm:$0xf]
    %v363 = vld [vmem:[#allocation10 + $0x38] sm:$0xf]
    %v364 = vld [vmem:[#allocation10 + $0x3c] sm:$0xf]
    %v366 = vlaneseq
    %v367 = vshrl.u32 %v366, 7
    %v368 = vsub.s32 0, %v367
    %v369 = vrot.slane %v113, %v368
    %v387 = vunpack.c.l.b16 %v349
    %v388 = vunpack.c.l.b16 %v350
    %v389 = vunpack.c.l.b16 %v351
    %v390 = vunpack.c.l.b16 %v352
    %v391 = vunpack.c.l.b16 %v353
    %v392 = vunpack.c.l.b16 %v354
    %v393 = vunpack.c.l.b16 %v355
    %v394 = vunpack.c.l.b16 %v356
    %v395 = vunpack.c.l.b16 %v357
    %v396 = vunpack.c.l.b16 %v358
    %v397 = vunpack.c.l.b16 %v359
    %v398 = vunpack.c.l.b16 %v360
    %v399 = vunpack.c.l.b16 %v361
    %v400 = vunpack.c.l.b16 %v362
    %v401 = vunpack.c.l.b16 %v363
    %v402 = vunpack.c.l.b16 %v364
    %v403 = vpack.c.b16 %v388, %v387
    %v404 = vpack.c.b16 %v390, %v389
    %v405 = vpack.c.b16 %v392, %v391
    %v406 = vpack.c.b16 %v394, %v393
    %v407 = vpack.c.b16 %v396, %v395
    %v408 = vpack.c.b16 %v398, %v397
    %v409 = vpack.c.b16 %v400, %v399
    %v410 = vpack.c.b16 %v402, %v401
    %419 = vmatprep.subr.bf16.mxu0 0
    %420 = vmatpush1.bf16.msra.mxu0 %v403
    %421 = vmatprep.subr.bf16.mxu0 0
    %422 = vmatpush1.bf16.msra.mxu0 %v404
    %423 = vmatprep.subr.bf16.mxu0 0
    %424 = vmatpush1.bf16.msra.mxu0 %v405
    %425 = vmatprep.subr.bf16.mxu0 0
    %426 = vmatpush1.bf16.msra.mxu0 %v406
    %427 = vmatprep.subr.bf16.mxu0 0
    %428 = vmatpush1.bf16.msra.mxu0 %v407
    %429 = vmatprep.subr.bf16.mxu0 0
    %430 = vmatpush1.bf16.msra.mxu0 %v408
    %431 = vmatprep.subr.bf16.mxu0 0
    %432 = vmatpush1.bf16.msra.mxu0 %v409
    %433 = vmatprep.subr.bf16.mxu0 0
    %434 = vmatpush1.bf16.msra.mxu0 %v410
    %435 = vmatprep.subr.bf16.mxu0 0
    %436 = vmatpush1.bf16.msra.mxu0 0
    %437 = vmatprep.subr.bf16.mxu0 0
    %438 = vmatpush1.bf16.msra.mxu0 0
    %439 = vmatprep.subr.bf16.mxu0 0
    %440 = vmatpush1.bf16.msra.mxu0 0
    %441 = vmatprep.subr.bf16.mxu0 0
    %442 = vmatpush1.bf16.msra.mxu0 0
    %443 = vmatprep.subr.bf16.mxu0 0
    %444 = vmatpush1.bf16.msra.mxu0 0
    %445 = vmatprep.subr.bf16.mxu0 0
    %446 = vmatpush1.bf16.msra.mxu0 0
    %447 = vmatprep.subr.bf16.mxu0 0
    %448 = vmatpush1.bf16.msra.mxu0 0
    %449 = vmatprep.subr.bf16.mxu0 0
    %450 = vmatpush1.bf16.msra.mxu0 0
    %451 = vmatprep.mubr.bf16.mxu0 0
    %452 = vmatmul.mubr.bf16.gmra.mrb[0].mxu0 %v348
    %v453 = vpop.f32.mrb[0].mxu0
    %v454 = vadd.f32 %v369, %v453
    %v455 = vpop.f32.mrb[0].mxu0
    %v456 = vpop.f32.mrb[0].mxu0
    %v457 = vpop.f32.mrb[0].mxu0
    %458 = vdwg.mxu0
    %v459 = vmax.f32 %v454, 0.0
    %v460 = vpack.c.bf16 %v459, %v459
    %v461 = vld [vmem:[#allocation11] sm:$0xf]
    %v462 = vld [vmem:[#allocation11 + $0x4] sm:$0xf]
    %v463 = vld [vmem:[#allocation11 + $0x8] sm:$0xf]
    %v464 = vld [vmem:[#allocation11 + $0xc] sm:$0xf]
    %v465 = vld [vmem:[#allocation11 + $0x10] sm:$0xf]
    %v466 = vld [vmem:[#allocation11 + $0x14] sm:$0xf]
    %v467 = vld [vmem:[#allocation11 + $0x18] sm:$0xf]
    %v468 = vld [vmem:[#allocation11 + $0x1c] sm:$0xf]
    %v469 = vld [vmem:[#allocation11 + $0x20] sm:$0xf]
    %v470 = vld [vmem:[#allocation11 + $0x24] sm:$0xf]
    %v471 = vld [vmem:[#allocation11 + $0x28] sm:$0xf]
    %v472 = vld [vmem:[#allocation11 + $0x2c] sm:$0xf]
    %v473 = vld [vmem:[#allocation11 + $0x30] sm:$0xf]
    %v474 = vld [vmem:[#allocation11 + $0x34] sm:$0xf]
    %v475 = vld [vmem:[#allocation11 + $0x38] sm:$0xf]
    %v476 = vld [vmem:[#allocation11 + $0x3c] sm:$0xf]
    %v478 = vlaneseq
    %v479 = vshrl.u32 %v478, 7
    %v480 = vsub.s32 0, %v479
    %v481 = vrot.slane %v114, %v480
    %v499 = vunpack.c.l.b16 %v461
    %v500 = vunpack.c.l.b16 %v462
    %v501 = vunpack.c.l.b16 %v463
    %v502 = vunpack.c.l.b16 %v464
    %v503 = vunpack.c.l.b16 %v465
    %v504 = vunpack.c.l.b16 %v466
    %v505 = vunpack.c.l.b16 %v467
    %v506 = vunpack.c.l.b16 %v468
    %v507 = vunpack.c.l.b16 %v469
    %v508 = vunpack.c.l.b16 %v470
    %v509 = vunpack.c.l.b16 %v471
    %v510 = vunpack.c.l.b16 %v472
    %v511 = vunpack.c.l.b16 %v473
    %v512 = vunpack.c.l.b16 %v474
    %v513 = vunpack.c.l.b16 %v475
    %v514 = vunpack.c.l.b16 %v476
    %v515 = vpack.c.b16 %v500, %v499
    %v516 = vpack.c.b16 %v502, %v501
    %v517 = vpack.c.b16 %v504, %v503
    %v518 = vpack.c.b16 %v506, %v505
    %v519 = vpack.c.b16 %v508, %v507
    %v520 = vpack.c.b16 %v510, %v509
    %v521 = vpack.c.b16 %v512, %v511
    %v522 = vpack.c.b16 %v514, %v513
    %531 = vmatprep.subr.bf16.mxu0 0
    %532 = vmatpush1.bf16.msra.mxu0 %v515
    %533 = vmatprep.subr.bf16.mxu0 0
    %534 = vmatpush1.bf16.msra.mxu0 %v516
    %535 = vmatprep.subr.bf16.mxu0 0
    %536 = vmatpush1.bf16.msra.mxu0 %v517
    %537 = vmatprep.subr.bf16.mxu0 0
    %538 = vmatpush1.bf16.msra.mxu0 %v518
    %539 = vmatprep.subr.bf16.mxu0 0
    %540 = vmatpush1.bf16.msra.mxu0 %v519
    %541 = vmatprep.subr.bf16.mxu0 0
    %542 = vmatpush1.bf16.msra.mxu0 %v520
    %543 = vmatprep.subr.bf16.mxu0 0
    %544 = vmatpush1.bf16.msra.mxu0 %v521
    %545 = vmatprep.subr.bf16.mxu0 0
    %546 = vmatpush1.bf16.msra.mxu0 %v522
    %547 = vmatprep.subr.bf16.mxu0 0
    %548 = vmatpush1.bf16.msra.mxu0 0
    %549 = vmatprep.subr.bf16.mxu0 0
    %550 = vmatpush1.bf16.msra.mxu0 0
    %551 = vmatprep.subr.bf16.mxu0 0
    %552 = vmatpush1.bf16.msra.mxu0 0
    %553 = vmatprep.subr.bf16.mxu0 0
    %554 = vmatpush1.bf16.msra.mxu0 0
    %555 = vmatprep.subr.bf16.mxu0 0
    %556 = vmatpush1.bf16.msra.mxu0 0
    %557 = vmatprep.subr.bf16.mxu0 0
    %558 = vmatpush1.bf16.msra.mxu0 0
    %559 = vmatprep.subr.bf16.mxu0 0
    %560 = vmatpush1.bf16.msra.mxu0 0
    %561 = vmatprep.subr.bf16.mxu0 0
    %562 = vmatpush1.bf16.msra.mxu0 0
    %563 = vmatprep.mubr.bf16.mxu0 0
    %564 = vmatmul.mubr.bf16.gmra.mrb[0].mxu0 %v460
    %v565 = vpop.f32.mrb[0].mxu0
    %v566 = vadd.f32 %v481, %v565
    %v567 = vpop.f32.mrb[0].mxu0
    %v568 = vpop.f32.mrb[0].mxu0
    %v569 = vpop.f32.mrb[0].mxu0
    %570 = vdwg.mxu0
    %v571 = vmax.f32 %v566, 0.0
    %572 = vst [vmem:[#allocation13] sm:$0xff] %v571
    %573 = vst [vmem:[#allocation14] sm:$0xff] %v347
    %574 = vst [vmem:[#allocation14 + $0x8] sm:$0xff] %v338
    // Predicated region
    $region54: #{tpu_custom_call.1} parent=1 // pred_check
      _
    $region55: #{tpu_custom_call.1} parent=1 // pred_check_branch
      %576 = sbr.rel (0) target = $region57
    $region56: #{tpu_custom_call.1} parent=1 // pred_region
      %s578 = ssub.s32 128, 128
      %579 = vsyncadd [#allocation4], %s578
      %s581 = sshll.u32 [#allocation13], 4
      %s582 = int_to_ptr.vmem [resolvable:$true] %s581
      %584 = dma.vmem_to_hbm [thread:$0]  %s582, 128, %s7, [#allocation4]
    $region57: #{tpu_custom_call.1} parent=1 // pred_fallthru
      _
    // Predicated region
    $region58: #{tpu_custom_call.1} parent=1 // pred_check
      _
    $region59: #{tpu_custom_call.1} parent=1 // pred_check_branch
      %586 = sbr.rel (0) target = $region61
    $region60: #{tpu_custom_call.1} parent=1 // pred_region
      %s588 = ssub.s32 256, 256
      %589 = vsyncadd [#allocation15], %s588
      %s591 = sshll.u32 [#allocation14], 4
      %s592 = int_to_ptr.vmem [resolvable:$true] %s591
      %594 = dma.vmem_to_hbm [thread:$0]  %s592, 256, %s8, [#allocation15]
    $region61: #{tpu_custom_call.1} parent=1 // pred_fallthru
      _
    // Predicated region
    $region62: #{tpu_custom_call.1} parent=1 // pred_check
      _
    $region63: #{tpu_custom_call.1} parent=1 // pred_check_branch
      %596 = sbr.rel (0) target = $region65
    $region64: #{tpu_custom_call.1} parent=1 // pred_region
      %597 = dma.done [#allocation4], 128
    $region65: #{tpu_custom_call.1} parent=1 // pred_fallthru
      _
    // Predicated region
    $region66: #{tpu_custom_call.1} parent=1 // pred_check
      _
    $region67: #{tpu_custom_call.1} parent=1 // pred_check_branch
      %599 = sbr.rel (0) target = $region69
    $region68: #{tpu_custom_call.1} parent=1 // pred_region
      %600 = dma.done [#allocation15], 256
    $region69: #{tpu_custom_call.1} parent=1 // pred_fallthru
      _
    %601 = vsyncpa [#allocation3], 1
    %602 = vsyncpa [#allocation6], 1
    %603 = vsyncpa [#allocation9], 1
    %604 = vsyncpa [#allocation12], 1
    %605 = vsyncpa [#allocation4], 1
    %606 = vsyncpa [#allocation15], 1

</llo_original>
